<compile_context>
chip_gen: v7x
topology: tpu7x:2x2x1
jax: 0.10.0
libtpu: 0.0.40
codegen_flags: <defaults>
</compile_context>

<pallas_src>
import math

import jax
import jax.numpy as jnp
from jax.experimental import pallas as pl
from jax.experimental.pallas import tpu as pltpu


_LANES = 128
_MIB = 1 << 20


def _add_pe_kernel(x_ref, pe_ref, o_ref):
    # x_ref: (B_blk, tR, tC) or (1, tR, tC); pe_ref: (tR, tC) broadcasts over the batch dim.
    o_ref[...] = x_ref[...] + pe_ref[...]


def make_pe_buffer(d_model: int, max_len: int = 5000, dtype=jnp.float32) -> jnp.ndarray:
    """Sinusoidal positional-encoding buffer, same formula as the PyTorch module.

    Build it in the activation dtype once at init so forward never re-casts.
    """
    position = jnp.arange(0, max_len, dtype=jnp.float32)[:, None]            # (max_len, 1)
    div_term = jnp.exp(
        jnp.arange(0, d_model, 2, dtype=jnp.float32) * (-math.log(10000.0) / d_model)
    )
    pe = jnp.zeros((max_len, d_model), dtype=jnp.float32)
    pe = pe.at[:, 0::2].set(jnp.sin(position * div_term))
    pe = pe.at[:, 1::2].set(jnp.cos(position * div_term[: d_model // 2]))
    return pe.astype(dtype)


def _hw_budgets():
    """Return (per-tensor tile byte budget, scoped VMEM limit) for this TPU generation."""
    vmem_cap = None
    try:
        info = pltpu.get_tpu_info()
        vmem_cap = getattr(info, "vmem_capacity_bytes", None)
    except Exception:
        vmem_cap = None
    tile = 8 * _MIB  # 3 tensors x 2 buffers x 8 MiB = 48 MiB worst case
    if vmem_cap is not None and vmem_cap > 64 * _MIB:
        limit = 96 * _MIB   # v5e / v6e: 128 MiB physical VMEM
    else:
        limit = 56 * _MIB   # v7x (64 MiB physical) and conservative fallback
    return tile, limit


def _sublane_multiple(itemsize: int) -> int:
    # Sub-32-bit dtypes pack along sublanes: 8 rows (f32/i32), 16 (bf16), 32 (int8/fp8).
    return 8 * max(1, 4 // itemsize)


def _pick_tiles(R: int, C: int, itemsize: int, tile_bytes: int, sub: int):
    """Pick (tR, tC): lane-axis tile only if a single sublane group already busts the budget."""
    if C % _LANES != 0 or sub * C * itemsize <= tile_bytes:
        tC = C
    else:
        tC = max(_LANES, (tile_bytes // (sub * itemsize)) // _LANES * _LANES)
        tC = min(tC, C)
    row_bytes = tC * itemsize
    budget_rows = max(sub, (tile_bytes // row_bytes) // sub * sub)
    tR = R if R <= budget_rows else budget_rows
    return tR, tC


def _small_add(x3, pe_rows, vmem_limit, donate):
    """Whole problem fits in one tile: single-step pallas_call, full-array blocks."""
    return pl.pallas_call(
        _add_pe_kernel,
        out_shape=jax.ShapeDtypeStruct(x3.shape, x3.dtype),
        compiler_params=pltpu.CompilerParams(vmem_limit_bytes=vmem_limit),
        input_output_aliases=({0: 0} if donate else {}),
    )(x3, pe_rows)


def _tiled_add(x3, pe_arg, tR, tC, vmem_limit, donate):
    """out[b, r, c] = x3[b, r, c] + pe_arg[r, c] with (tR, tC) tiles, pe resident over b."""
    B, R, C = x3.shape
    grid = (pl.cdiv(R, tR), pl.cdiv(C, tC), B)  # B innermost: pe block index constant over b
    return pl.pallas_call(
        _add_pe_kernel,
        out_shape=jax.ShapeDtypeStruct((B, R, C), x3.dtype),
        grid=grid,
        in_specs=[
            pl.BlockSpec((1, tR, tC), lambda s, c, b: (b, s, c)),
            pl.BlockSpec((tR, tC), lambda s, c, b: (s, c)),
        ],
        out_specs=pl.BlockSpec((1, tR, tC), lambda s, c, b: (b, s, c)),
        compiler_params=pltpu.CompilerParams(
            # Shard row/lane tiles across cores; batch stays "arbitrary" so each core keeps
            # the pe-reuse-across-batch pattern (no duplicated pe fetches on 2-TC chips).
            dimension_semantics=("parallel", "parallel", "arbitrary"),
            vmem_limit_bytes=vmem_limit,
        ),
        input_output_aliases=({0: 0} if donate else {}),
    )(x3, pe_arg)


def positional_encoding_forward(x: jnp.ndarray, pe: jnp.ndarray, *, donate_x: bool = False):
    """x: (B, S, D); pe: (max_len, D). Returns x + pe[:S] broadcast over batch.

    donate_x=True declares input/output aliasing; only effective if the caller actually
    donates x (jit donate_argnums) and never reads it afterwards.
    """
    if x.ndim != 3:
        raise ValueError(f"expected x of rank 3 (B, S, D), got shape {x.shape}")
    B, S, D = x.shape
    max_len, d_model = pe.shape
    if d_model != D:
        raise ValueError(f"d_model mismatch: x has D={D}, pe has {d_model}")
    if S > max_len:
        raise ValueError(f"sequence length {S} exceeds max_len {max_len}")

    tile_bytes, vmem_limit = _hw_budgets()
    itemsize = jnp.dtype(x.dtype).itemsize
    sub = _sublane_multiple(itemsize)
    dtype_mismatch = pe.dtype != x.dtype

    if D % _LANES != 0 and (S * D) % _LANES == 0:
        # Narrow, non-lane-aligned D: repack into lane-dense (B, R, 128) slabs.
        R, C = (S * D) // _LANES, _LANES
        x3 = x.reshape(B, R, C)
        pe_arg = pe[:S]
        if dtype_mismatch:
            pe_arg = pe_arg.astype(x.dtype)  # cast only S rows, never the full max_len buffer
        pe_arg = pe_arg.reshape(R, C)
        reshaped = True
    else:
        R, C = S, D
        x3 = x
        # Keep the full buffer and let the BlockSpec do the [:S] slice (zero extra copy),
        # unless a dtype cast is needed — then cast only the S rows actually used.
        pe_arg = pe[:S].astype(x.dtype) if dtype_mismatch else pe
        reshaped = False

    # Small-tensor fast path: one grid step, no per-step overhead.
    if B * R * C * itemsize <= tile_bytes:
        pe_rows = pe_arg if pe_arg.shape[0] == R else pe_arg[:R]
        out = _small_add(x3, pe_rows, vmem_limit, donate_x)
        return out.reshape(B, S, D) if reshaped else out

    tR, tC = _pick_tiles(R, C, itemsize, tile_bytes, sub)
    if pe_arg.shape[0] != R and tR % 8 != 0:
        # tR == R (full x row dim) but not sublane-aligned: slice pe so the same block
        # shape is also legal on the pe operand (tiny copy, only for oddly-shaped S).
        pe_arg = pe_arg[:R]
    out = _tiled_add(x3, pe_arg, tR, tC, vmem_limit, donate_x)
    return out.reshape(B, S, D) if reshaped else out


if __name__ == "__main__":
    k0, k1, k2 = jax.random.split(jax.random.PRNGKey(0), 3)

    # Case 1 (module-scale): batch=2, seq=8, d_model=32 -> narrow-D repack, small fast path.
    B, S, D = 2, 8, 32
    x = jax.random.normal(k0, (B, S, D), dtype=jnp.float32)
    pe = make_pe_buffer(D, max_len=5000, dtype=jnp.float32)
    out = jax.block_until_ready(positional_encoding_forward(x, pe))
    ref = x + pe[:S][None, :, :]
    assert out.shape == (B, S, D)
    assert jnp.allclose(out, ref, atol=1e-6, rtol=1e-6)

    # Case 2: lane-aligned d_model=128, small fast path without repack.
    B2, S2, D2 = 2, 16, 128
    x2 = jax.random.normal(k1, (B2, S2, D2), dtype=jnp.float32)
    pe2 = make_pe_buffer(D2, max_len=5000, dtype=jnp.float32)
    out2 = jax.block_until_ready(positional_encoding_forward(x2, pe2))
    assert jnp.allclose(out2, x2 + pe2[:S2][None, :, :], atol=1e-6, rtol=1e-6)

    # Case 3: large enough for the tiled grid path (pe sliced purely via the BlockSpec).
    B3, S3, D3 = 2, 4096, 512
    x3 = jax.random.normal(k2, (B3, S3, D3), dtype=jnp.float32)
    pe3 = make_pe_buffer(D3, max_len=5000, dtype=jnp.float32)
    out3 = jax.block_until_ready(positional_encoding_forward(x3, pe3))
    assert jnp.allclose(out3, x3 + pe3[:S3][None, :, :], atol=1e-6, rtol=1e-6)

    print("KERNEL_OK")
</pallas_src>

<mosaic_0001>
module attributes {stable_mosaic.version = 11 : i64} {
  func.func @_add_pe_kernel(%arg0: memref<2x2x128xf32, #tpu.memory_space<vmem>>, %arg1: memref<2x128xf32, #tpu.memory_space<vmem>>, %arg2: memref<2x2x128xf32, #tpu.memory_space<vmem>>) attributes {dimension_semantics = [], scalar_prefetch = 0 : i64, scratch_operands = 0 : i64, tpu.core_type = #tpu.core_type<tc>} {
    %c0 = arith.constant 0 : index
    %c0_0 = arith.constant 0 : index
    %c0_1 = arith.constant 0 : index
    %0 = vector.load %arg0[%c0, %c0_0, %c0_1] : memref<2x2x128xf32, #tpu.memory_space<vmem>>, vector<2x2x128xf32>
    %c0_2 = arith.constant 0 : index
    %c0_3 = arith.constant 0 : index
    %1 = vector.load %arg1[%c0_2, %c0_3] : memref<2x128xf32, #tpu.memory_space<vmem>>, vector<2x128xf32>
    %2 = vector.shape_cast %1 : vector<2x128xf32> to vector<1x2x128xf32>
    %3 = vector.broadcast %2 : vector<1x2x128xf32> to vector<2x2x128xf32>
    %4 = arith.addf %0, %3 : vector<2x2x128xf32>
    %c0_4 = arith.constant 0 : index
    %c0_5 = arith.constant 0 : index
    %c0_6 = arith.constant 0 : index
    %5 = vector.load %arg2[%c0_4, %c0_5, %c0_6] : memref<2x2x128xf32, #tpu.memory_space<vmem>>, vector<2x2x128xf32>
    tpu.vector_store %arg2[%c0_4, %c0_5, %c0_6], %4 {strides = array<i32>} : memref<2x2x128xf32, #tpu.memory_space<vmem>>, vector<2x2x128xf32>,
    return
  }
}

</mosaic_0001>

<llo_original>
// kernel: tpu_custom_call.1
$region0: #{tpu_custom_call.1}
  #allocation0 [shape = 'u32[]', space=smem, size = 0x4, offset = 0x4, fixed_abs, tag = 'smem constant byte address 0x4 - core index']
  #allocation1 [shape = 'u32[144,128]{1,0:T(1,128)}', space=vmem, size = 0x12000, scoped, tag = 'internal scratch']
  %s0 = inlined_call_operand.hbm [shape: f32[2,2,128], index: 0, kind: input, shape index: {}]
  %s1 = inlined_call_operand.vmem [shape: f32[2,128], index: 1, kind: input, shape index: {}]
  %s2 = inlined_call_operand.hbm [shape: f32[2,2,128], index: 2, kind: output, shape index: {}]
  %s3 = sld [smem:[#allocation0]]
  $region22: #{tpu_custom_call.1} parent=0
    _
  %s5 = ssub.s32 1, %s3
  %s6 = scalar_select 0, %s5, %s3
  $region1: #{tpu_custom_call.1} parent=0
    #allocation2 [shape = 'u8[2048]{0}', space=vmem, size = 0x800, scoped, tag = 'input window, operand 0, single buffered']
    #allocation3 [shape = 's32[1]{0}', space=sflag, size = 0x4, scoped, tag = 'scoped memory for tpu_custom_call.1']
    #allocation4 [shape = 's32[1]{0}', space=sflag, size = 0x4, scoped, tag = 'scoped memory for tpu_custom_call.1']
    #allocation5 [shape = 'u8[2048]{0}', space=vmem, size = 0x800, scoped, tag = 'output window, operand 0, single buffered']
    %7 = vsyncpa [#allocation3], 0
    %8 = vsyncpa [#allocation4], 0
    // Predicated region
    $region2: #{tpu_custom_call.1} parent=1 // pred_check
      _
    $region3: #{tpu_custom_call.1} parent=1 // pred_check_branch
      %10 = sbr.rel (0) target = $region5
    $region4: #{tpu_custom_call.1} parent=1 // pred_region
      %s12 = ssub.s32 64, 64
      %13 = vsyncadd [#allocation3], %s12
      %s14 = sshll.u32 [#allocation2], 4
      %s15 = int_to_ptr.vmem [resolvable:$true] %s14
      %20 = dma.hbm_to_vmem [thread:$0]  %s0, 64, %s15, [#allocation3], 32, 32, 2
    $region5: #{tpu_custom_call.1} parent=1 // pred_fallthru
      _
    // Predicated region
    $region6: #{tpu_custom_call.1} parent=1 // pred_check
      _
    $region7: #{tpu_custom_call.1} parent=1 // pred_check_branch
      %22 = sbr.rel (0) target = $region9
    $region8: #{tpu_custom_call.1} parent=1 // pred_region
      _
    $region9: #{tpu_custom_call.1} parent=1 // pred_fallthru
      _
    // Predicated region
    $region10: #{tpu_custom_call.1} parent=1 // pred_check
      _
    $region11: #{tpu_custom_call.1} parent=1 // pred_check_branch
      %24 = sbr.rel (0) target = $region13
    $region12: #{tpu_custom_call.1} parent=1 // pred_region
      %25 = dma.done [#allocation3], 64
    $region13: #{tpu_custom_call.1} parent=1 // pred_fallthru
      _
    %v26 = vld [vmem:[#allocation2] sm:$0x3]
    %v27 = vld [vmem:[#allocation2 + $0x2] sm:$0x3]
    %v28 = vld [vmem:[%s1] sm:$0x3]
    %v29 = vadd.f32 %v26, %v28
    %v30 = vadd.f32 %v27, %v28
    %31 = vst [vmem:[#allocation5] sm:$0x3] %v29
    %32 = vst [vmem:[#allocation5 + $0x2] sm:$0x3] %v30
    // Predicated region
    $region14: #{tpu_custom_call.1} parent=1 // pred_check
      _
    $region15: #{tpu_custom_call.1} parent=1 // pred_check_branch
      %34 = sbr.rel (0) target = $region17
    $region16: #{tpu_custom_call.1} parent=1 // pred_region
      %s36 = ssub.s32 64, 64
      %37 = vsyncadd [#allocation4], %s36
      %s38 = sshll.u32 [#allocation5], 4
      %s39 = int_to_ptr.vmem [resolvable:$true] %s38
      %44 = dma.vmem_to_hbm [thread:$0]  %s39, 64, %s2, [#allocation4], 32, 32, 2
    $region17: #{tpu_custom_call.1} parent=1 // pred_fallthru
      _
    // Predicated region
    $region18: #{tpu_custom_call.1} parent=1 // pred_check
      _
    $region19: #{tpu_custom_call.1} parent=1 // pred_check_branch
      %46 = sbr.rel (0) target = $region21
    $region20: #{tpu_custom_call.1} parent=1 // pred_region
      %47 = dma.done [#allocation4], 64
    $region21: #{tpu_custom_call.1} parent=1 // pred_fallthru
      _
    %48 = vsyncpa [#allocation3], 1
    %49 = vsyncpa [#allocation4], 1

</llo_original>
